<compile_context>
chip_gen: v7x
topology: tpu7x:2x2x1
jax: 0.10.0
libtpu: 0.0.40
codegen_flags: <defaults>
</compile_context>

<pallas_src>
import functools

import jax
import jax.numpy as jnp
from jax import lax
from jax.experimental import pallas as pl
from jax.experimental.pallas import tpu as pltpu


VMEM_LIMIT = 32 * 1024 * 1024   # explicit scoped-VMEM budget (safe on v5e/v6e/v7x)
REC_CHUNK = 32                  # time-chunk streamed through the recurrences
HEAD_ROW_CAP = 256              # max rows per vocab-head matmul tile
HEAD_COL_CAP = 512              # max vocab columns per head tile


def _round_up(x, m):
    return (x + m - 1) // m * m


def _largest_divisor(n, cap, base):
    """Largest multiple of `base` dividing `n` (n % base == 0) that is <= cap."""
    best = base
    k = n // base
    for d in range(1, k + 1):
        if k % d == 0 and base * d <= cap:
            best = base * d
    return best


# ----------------------------- projection kernels ---------------------------

def _dense_kernel(x_ref, w_ref, b_ref, o_ref):
    """One (tm, K) @ (K, N) + b tile per grid step."""
    o_ref[...] = (jnp.dot(x_ref[...], w_ref[...],
                          preferred_element_type=jnp.float32)
                  + b_ref[...]).astype(o_ref.dtype)


def _enc_proj_kernel(xf_ref, xb_ref, wf_ref, wb_ref, b_ref, o_ref):
    """Fused bidirectional encoder input projection.

    Output columns use the per-gate interleaved layout
    [i_f,i_b,f_f,f_b,o_f,o_b,g_f,g_b].  xb is the *time-reversed* source
    stream, so the recurrence consumes a single xp[t] per step.  wf/wb carry
    zeros in the other direction's column groups (small FLOP waste, zero lane
    shuffles, single lane-dense store).
    """
    acc = jnp.dot(xf_ref[...], wf_ref[...], preferred_element_type=jnp.float32)
    acc = acc + jnp.dot(xb_ref[...], wb_ref[...],
                        preferred_element_type=jnp.float32)
    o_ref[...] = (acc + b_ref[...]).astype(o_ref.dtype)


def _vocab_head_kernel(h_ref, w_ref, b_ref, o_ref):
    """Logits tile: (Th, H) @ (H, tv) + b, written batch-major."""
    o_ref[0] = (jnp.dot(h_ref[0], w_ref[...],
                        preferred_element_type=jnp.float32) + b_ref[...])


# ----------------------------- recurrence kernels ---------------------------

def _encoder_rec_kernel(xp_ref, whh_ref, hw_ref, hb_ref, cw_ref, cb_ref,
                        h0_ref, c0_ref, h_sc, c_sc, *, seq_len):
    """Fused bidirectional LSTM recurrence (one time-chunk per grid step) +
    hidden/cell projections in the epilogue of the last chunk.

    xp_ref : (Tc, B, 8*He) bf16 — interleaved gates, bwd stream time-reversed.
    whh_ref: (2*He, 8*He) bf16 block-diagonal recurrent weights.
    h_sc/c_sc: (B, 2*He) f32 VMEM scratch, persists across grid steps.
    """
    Tc = xp_ref.shape[0]
    He2 = whh_ref.shape[0]
    He6 = 3 * He2
    ci = pl.program_id(0)

    @pl.when(ci == 0)
    def _():
        h_sc[...] = jnp.zeros_like(h_sc)
        c_sc[...] = jnp.zeros_like(c_sc)

    whh = whh_ref[...]
    t0 = ci * Tc

    def step(k, carry):
        h, c = carry
        gates = xp_ref[k].astype(jnp.float32) + jnp.dot(
            h.astype(whh.dtype), whh, preferred_element_type=jnp.float32)
        sg = jax.nn.sigmoid(gates[:, :He6])      # [i_f,i_b, f_f,f_b, o_f,o_b]
        g_g = jnp.tanh(gates[:, He6:])           # [g_f, g_b]
        i_g = sg[:, :He2]
        f_g = sg[:, He2:2 * He2]
        o_g = sg[:, 2 * He2:]
        c_new = f_g * c + i_g * g_g
        h_new = o_g * jnp.tanh(c_new)
        valid = (t0 + k) < seq_len               # guard time-padding steps
        return (jnp.where(valid, h_new, h), jnp.where(valid, c_new, c))

    h_fin, c_fin = lax.fori_loop(0, Tc, step, (h_sc[...], c_sc[...]), unroll=2)
    h_sc[...] = h_fin
    c_sc[...] = c_fin

    @pl.when(ci == pl.num_programs(0) - 1)
    def _():
        # [h_fwd | h_bwd] == torch.cat([h_n[0], h_n[1]], -1); same for cells.
        h0_ref[...] = (jnp.dot(h_fin, hw_ref[...],
                               preferred_element_type=jnp.float32) + hb_ref[...])
        c0_ref[...] = (jnp.dot(c_fin, cw_ref[...],
                               preferred_element_type=jnp.float32) + cb_ref[...])


def _decoder_rec_kernel(xp_ref, whh_ref, h0_ref, c0_ref, hseq_ref, h_sc, c_sc):
    """Decoder LSTM recurrence (one time-chunk per grid step); emits the
    hidden sequence in bf16 — the vocab head is a separate tiled matmul."""
    Tc = xp_ref.shape[0]
    H = whh_ref.shape[0]
    H3 = 3 * H

    @pl.when(pl.program_id(0) == 0)
    def _():
        h_sc[...] = h0_ref[...]
        c_sc[...] = c0_ref[...]

    whh = whh_ref[...]

    def step(k, carry):
        h, c = carry
        gates = xp_ref[k].astype(jnp.float32) + jnp.dot(
            h.astype(whh.dtype), whh, preferred_element_type=jnp.float32)
        sg = jax.nn.sigmoid(gates[:, :H3])       # [i, f, o]
        g_g = jnp.tanh(gates[:, H3:])
        c_new = sg[:, H:2 * H] * c + sg[:, :H] * g_g
        h_new = sg[:, 2 * H:] * jnp.tanh(c_new)
        hseq_ref[k] = h_new.astype(jnp.bfloat16)
        return (h_new, c_new)

    h_fin, c_fin = lax.fori_loop(0, Tc, step, (h_sc[...], c_sc[...]), unroll=2)
    h_sc[...] = h_fin
    c_sc[...] = c_fin


# --------------------------------- wrappers ---------------------------------

def dense_pallas(x, w, b, out_dtype=jnp.bfloat16):
    M, K = x.shape
    N = w.shape[1]
    tm = _largest_divisor(M, 512, 8)
    cost = pl.CostEstimate(
        flops=2 * M * K * N, transcendentals=0,
        bytes_accessed=M * K * x.dtype.itemsize + K * N * w.dtype.itemsize
        + M * N * jnp.dtype(out_dtype).itemsize)
    return pl.pallas_call(
        _dense_kernel,
        out_shape=jax.ShapeDtypeStruct((M, N), out_dtype),
        grid=(M // tm,),
        in_specs=[pl.BlockSpec((tm, K), lambda i: (i, 0)),
                  pl.BlockSpec((K, N), lambda i: (0, 0)),
                  pl.BlockSpec((1, N), lambda i: (0, 0))],
        out_specs=pl.BlockSpec((tm, N), lambda i: (i, 0)),
        compiler_params=pltpu.CompilerParams(
            dimension_semantics=("parallel",), vmem_limit_bytes=VMEM_LIMIT),
        cost_estimate=cost,
    )(x, w, b)


def enc_proj_pallas(xf, xb, wf, wb, b, out_dtype=jnp.bfloat16):
    M, K = xf.shape
    N = wf.shape[1]
    tm = _largest_divisor(M, 512, 8)
    cost = pl.CostEstimate(
        flops=4 * M * K * N, transcendentals=0,
        bytes_accessed=2 * M * K * 2 + 2 * K * N * 2
        + M * N * jnp.dtype(out_dtype).itemsize)
    return pl.pallas_call(
        _enc_proj_kernel,
        out_shape=jax.ShapeDtypeStruct((M, N), out_dtype),
        grid=(M // tm,),
        in_specs=[pl.BlockSpec((tm, K), lambda i: (i, 0)),
                  pl.BlockSpec((tm, K), lambda i: (i, 0)),
                  pl.BlockSpec((K, N), lambda i: (0, 0)),
                  pl.BlockSpec((K, N), lambda i: (0, 0)),
                  pl.BlockSpec((1, N), lambda i: (0, 0))],
        out_specs=pl.BlockSpec((tm, N), lambda i: (i, 0)),
        compiler_params=pltpu.CompilerParams(
            dimension_semantics=("parallel",), vmem_limit_bytes=VMEM_LIMIT),
        cost_estimate=cost,
    )(xf, xb, wf, wb, b)


def encoder_rec_pallas(xp, whh, hw, hb, cw, cb, *, seq_len):
    Tp, B, G = xp.shape
    He2 = whh.shape[0]
    H = hw.shape[1]
    Tc = min(REC_CHUNK, Tp)
    kernel = functools.partial(_encoder_rec_kernel, seq_len=seq_len)
    return pl.pallas_call(
        kernel,
        out_shape=(jax.ShapeDtypeStruct((B, H), jnp.float32),
                   jax.ShapeDtypeStruct((B, H), jnp.float32)),
        grid=(Tp // Tc,),
        in_specs=[pl.BlockSpec((Tc, B, G), lambda c: (c, 0, 0)),
                  pl.BlockSpec((He2, G), lambda c: (0, 0)),
                  pl.BlockSpec((He2, H), lambda c: (0, 0)),
                  pl.BlockSpec((1, H), lambda c: (0, 0)),
                  pl.BlockSpec((He2, H), lambda c: (0, 0)),
                  pl.BlockSpec((1, H), lambda c: (0, 0))],
        out_specs=(pl.BlockSpec((B, H), lambda c: (0, 0)),
                   pl.BlockSpec((B, H), lambda c: (0, 0))),
        scratch_shapes=[pltpu.VMEM((B, He2), jnp.float32),
                        pltpu.VMEM((B, He2), jnp.float32)],
        compiler_params=pltpu.CompilerParams(
            dimension_semantics=("arbitrary",), vmem_limit_bytes=VMEM_LIMIT),
    )(xp, whh, hw, hb, cw, cb)


def decoder_rec_pallas(xp, whh, h0, c0):
    Tp, B, G = xp.shape
    H = whh.shape[0]
    Tc = min(REC_CHUNK, Tp)
    return pl.pallas_call(
        _decoder_rec_kernel,
        out_shape=jax.ShapeDtypeStruct((Tp, B, H), jnp.bfloat16),
        grid=(Tp // Tc,),
        in_specs=[pl.BlockSpec((Tc, B, G), lambda c: (c, 0, 0)),
                  pl.BlockSpec((H, G), lambda c: (0, 0)),
                  pl.BlockSpec((B, H), lambda c: (0, 0)),
                  pl.BlockSpec((B, H), lambda c: (0, 0))],
        out_specs=pl.BlockSpec((Tc, B, H), lambda c: (c, 0, 0)),
        scratch_shapes=[pltpu.VMEM((B, H), jnp.float32),
                        pltpu.VMEM((B, H), jnp.float32)],
        compiler_params=pltpu.CompilerParams(
            dimension_semantics=("arbitrary",), vmem_limit_bytes=VMEM_LIMIT),
    )(xp, whh, h0, c0)


def vocab_head_pallas(h_bt, w, b):
    """h_bt: (B, Tp, H) bf16; w: (H, Vp) bf16; b: (1, Vp) f32 -> (B, Tp, Vp) f32."""
    B, Tp, H = h_bt.shape
    Vp = w.shape[1]
    Th = _largest_divisor(Tp, HEAD_ROW_CAP, 8)
    tv = _largest_divisor(Vp, HEAD_COL_CAP, 128)
    cost = pl.CostEstimate(
        flops=2 * B * Tp * H * Vp, transcendentals=0,
        bytes_accessed=B * Tp * H * 2 + H * Vp * 2 + B * Tp * Vp * 4)
    return pl.pallas_call(
        _vocab_head_kernel,
        out_shape=jax.ShapeDtypeStruct((B, Tp, Vp), jnp.float32),
        grid=(B, Tp // Th, Vp // tv),          # vocab tiles innermost: h reused
        in_specs=[pl.BlockSpec((1, Th, H), lambda bb, i, j: (bb, i, 0)),
                  pl.BlockSpec((H, tv), lambda bb, i, j: (0, j)),
                  pl.BlockSpec((1, tv), lambda bb, i, j: (0, j))],
        out_specs=pl.BlockSpec((1, Th, tv), lambda bb, i, j: (bb, i, j)),
        compiler_params=pltpu.CompilerParams(
            dimension_semantics=("parallel", "parallel", "parallel"),
            vmem_limit_bytes=VMEM_LIMIT),
        cost_estimate=cost,
    )(h_bt, w, b)


# --------------------------------- parameters --------------------------------

def init_params(key, vocab_size, embed_size, hidden_size, enc_hidden_size):
    V, E, H, He = vocab_size, embed_size, hidden_size, enc_hidden_size
    Vp = _round_up(V, 128)
    bf16 = jnp.bfloat16
    ks = jax.random.split(key, 20)

    def u(k, shape, scale=0.1):
        return jax.random.uniform(k, shape, jnp.float32, -scale, scale)

    p = {"vocab_size": V}
    p["enc_embed"] = u(ks[0], (V, E))
    p["dec_embed"] = u(ks[1], (V, E))

    # Bidirectional encoder LSTM: per-direction (in, 4He) weights, gate order
    # [i, f, o, g], bias = b_ih + b_hh folded; packed into the per-gate
    # interleaved column layout [i_f,i_b,f_f,f_b,o_f,o_b,g_f,g_b].
    wih_f, whh_f, b_f = u(ks[2], (E, 4 * He)), u(ks[3], (He, 4 * He)), u(ks[4], (1, 4 * He))
    wih_b, whh_b, b_b = u(ks[5], (E, 4 * He)), u(ks[6], (He, 4 * He)), u(ks[7], (1, 4 * He))
    z_ih = jnp.zeros((E, He), jnp.float32)
    z_hh = jnp.zeros((He, He), jnp.float32)
    wf_cols, wb_cols, whh_cols, b_cols = [], [], [], []
    for k in range(4):
        sl = slice(k * He, (k + 1) * He)
        wf_cols += [wih_f[:, sl], z_ih]
        wb_cols += [z_ih, wih_b[:, sl]]
        whh_cols += [jnp.concatenate([whh_f[:, sl], z_hh], axis=0),   # fwd rows
                     jnp.concatenate([z_hh, whh_b[:, sl]], axis=0)]   # bwd rows
        b_cols += [b_f[:, sl], b_b[:, sl]]
    p["enc_wih_f"] = jnp.concatenate(wf_cols, axis=1).astype(bf16)    # (E, 8He)
    p["enc_wih_b"] = jnp.concatenate(wb_cols, axis=1).astype(bf16)    # (E, 8He)
    p["enc_whh"] = jnp.concatenate(whh_cols, axis=1).astype(bf16)     # (2He, 8He)
    p["enc_b"] = jnp.concatenate(b_cols, axis=1)                      # (1, 8He) f32

    p["hidden_proj_w"] = u(ks[8], (2 * He, H))
    p["hidden_proj_b"] = u(ks[9], (1, H))
    p["cell_proj_w"] = u(ks[10], (2 * He, H))
    p["cell_proj_b"] = u(ks[11], (1, H))

    # Decoder LSTM (gate order [i, f, o, g], bias folded).
    p["dec_wih"] = u(ks[12], (E, 4 * H)).astype(bf16)
    p["dec_whh"] = u(ks[13], (H, 4 * H)).astype(bf16)
    p["dec_b"] = u(ks[14], (1, 4 * H))

    # Vocab head, padded to a 128-lane multiple for lane-dense stores.
    fc_w = u(ks[15], (H, V))
    fc_b = u(ks[16], (1, V))
    p["fc_w"] = jnp.zeros((H, Vp), jnp.float32).at[:, :V].set(fc_w).astype(bf16)
    p["fc_b"] = jnp.zeros((1, Vp), jnp.float32).at[:, :V].set(fc_b)

    # W_h, W_s, v, p_gen_linear exist on the module but are unused in forward().
    return p


# ---------------------------------- forward ----------------------------------

def as2sp_forward(params, src_graph, trg_text):
    B, Ss = src_graph.shape
    St = trg_text.shape[1]
    E = params["enc_embed"].shape[1]
    Ge = params["enc_whh"].shape[1]          # 8*He
    Gd = params["dec_wih"].shape[1]          # 4*H
    V = params["vocab_size"]

    Bp = _round_up(B, 8)                     # sublane-pad batch
    Ssp = _round_up(Ss, REC_CHUNK)           # time-pad to the streaming chunk
    Stp = _round_up(St, REC_CHUNK)

    def pad_idx(idx, t_pad):
        b0, t0 = idx.shape
        return jnp.zeros((Bp, t_pad), idx.dtype).at[:b0, :t0].set(idx)

    # Embedding gathers into time-major (T, B, E); the encoder's backward
    # stream reverses the *indices* (free).  Dropout = identity (eval mode).
    src_f = pad_idx(src_graph, Ssp)
    src_b = pad_idx(src_graph[:, ::-1], Ssp)
    trg_p = pad_idx(trg_text, Stp)
    bf16 = jnp.bfloat16
    enc_xf = jnp.take(params["enc_embed"], src_f.T, axis=0).astype(bf16)   # (Ssp,Bp,E)
    enc_xb = jnp.take(params["enc_embed"], src_b.T, axis=0).astype(bf16)
    dec_x = jnp.take(params["dec_embed"], trg_p.T, axis=0).astype(bf16)    # (Stp,Bp,E)

    # Hoisted, grid-tiled input projections (bf16 outputs).
    xp_enc = enc_proj_pallas(enc_xf.reshape(Ssp * Bp, E),
                             enc_xb.reshape(Ssp * Bp, E),
                             params["enc_wih_f"], params["enc_wih_b"],
                             params["enc_b"])
    xp_dec = dense_pallas(dec_x.reshape(Stp * Bp, E),
                          params["dec_wih"], params["dec_b"])

    # Fused bidirectional encoder recurrence (streamed xp) + hidden/cell
    # projections -> decoder initial state.
    dec_h0, dec_c0 = encoder_rec_pallas(
        xp_enc.reshape(Ssp, Bp, Ge), params["enc_whh"],
        params["hidden_proj_w"], params["hidden_proj_b"],
        params["cell_proj_w"], params["cell_proj_b"], seq_len=Ss)

    # Decoder recurrence -> bf16 hidden sequence (vocab head hoisted out).
    h_seq = decoder_rec_pallas(xp_dec.reshape(Stp, Bp, Gd),
                               params["dec_whh"], dec_h0, dec_c0)

    # Vocab head: grid-tiled, fully parallel matmul writing batch-major,
    # lane-dense logits.  Transposing h_seq (B*T*H) is ~V/H times cheaper than
    # transposing logits.
    h_bt = jnp.transpose(h_seq, (1, 0, 2))                  # (Bp, Stp, H)
    logits = vocab_head_pallas(h_bt, params["fc_w"], params["fc_b"])

    return logits[:B, :St, :V]                              # (B, St, V) f32


# ------------------------------------ main ------------------------------------

if __name__ == "__main__":
    vocab_size, embed_size, hidden_size, enc_hidden_size = 50, 32, 32, 16
    B, Ss, St = 2, 10, 8

    key = jax.random.PRNGKey(0)
    k_params, k_src, k_trg = jax.random.split(key, 3)

    params = init_params(k_params, vocab_size, embed_size, hidden_size,
                         enc_hidden_size)
    src_graph = jax.random.randint(k_src, (B, Ss), 0, vocab_size, dtype=jnp.int32)
    trg_text = jax.random.randint(k_trg, (B, St), 0, vocab_size, dtype=jnp.int32)

    preds = as2sp_forward(params, src_graph, trg_text)
    jax.block_until_ready(preds)
    assert preds.shape == (B, St, vocab_size), preds.shape
    assert preds.dtype == jnp.float32
    assert bool(jnp.all(jnp.isfinite(preds)))
    print("KERNEL_OK")
</pallas_src>

<mosaic_0001>
module attributes {stable_mosaic.version = 11 : i64} {
  func.func @_enc_proj_kernel(%arg0: i32, %arg1: memref<256x32xbf16, #tpu.memory_space<vmem>>, %arg2: memref<256x32xbf16, #tpu.memory_space<vmem>>, %arg3: memref<32x128xbf16, #tpu.memory_space<vmem>>, %arg4: memref<32x128xbf16, #tpu.memory_space<vmem>>, %arg5: memref<1x128xf32, #tpu.memory_space<vmem>>, %arg6: memref<256x128xbf16, #tpu.memory_space<vmem>>) attributes {dimension_semantics = [#tpu.dimension_semantics<parallel>], iteration_bounds = array<i64: 1>, scalar_prefetch = 0 : i64, scratch_operands = 0 : i64, tpu.core_type = #tpu.core_type<tc>, window_params = [{transform_indices = @transform_0, window_bounds = array<i64: 256, 32>}, {transform_indices = @transform_1, window_bounds = array<i64: 256, 32>}, {pipeline_mode = #tpu.pipeline_mode<synchronous>, transform_indices = @transform_2, window_bounds = array<i64: 32, 128>}, {pipeline_mode = #tpu.pipeline_mode<synchronous>, transform_indices = @transform_3, window_bounds = array<i64: 32, 128>}, {pipeline_mode = #tpu.pipeline_mode<synchronous>, transform_indices = @transform_4, window_bounds = array<i64: 1, 128>}, {transform_indices = @transform_5, window_bounds = array<i64: 256, 128>}]} {
    %c0 = arith.constant 0 : index
    %c0_0 = arith.constant 0 : index
    %0 = vector.load %arg1[%c0, %c0_0] : memref<256x32xbf16, #tpu.memory_space<vmem>>, vector<256x32xbf16>
    %c0_1 = arith.constant 0 : index
    %c0_2 = arith.constant 0 : index
    %1 = vector.load %arg3[%c0_1, %c0_2] : memref<32x128xbf16, #tpu.memory_space<vmem>>, vector<32x128xbf16>
    %cst = arith.constant dense<0.000000e+00> : vector<256x128xf32>
    %2 = tpu.matmul %0, %1, %cst {dimension_numbers = #tpu.dot_dimension_numbers<[1], [0], [0], [1], [0, 0, 1, 1], [], []>} : vector<256x32xbf16>, vector<32x128xbf16>, vector<256x128xf32> -> vector<256x128xf32>
    %c0_3 = arith.constant 0 : index
    %c0_4 = arith.constant 0 : index
    %3 = vector.load %arg2[%c0_3, %c0_4] : memref<256x32xbf16, #tpu.memory_space<vmem>>, vector<256x32xbf16>
    %c0_5 = arith.constant 0 : index
    %c0_6 = arith.constant 0 : index
    %4 = vector.load %arg4[%c0_5, %c0_6] : memref<32x128xbf16, #tpu.memory_space<vmem>>, vector<32x128xbf16>
    %cst_7 = arith.constant dense<0.000000e+00> : vector<256x128xf32>
    %5 = tpu.matmul %3, %4, %cst_7 {dimension_numbers = #tpu.dot_dimension_numbers<[1], [0], [0], [1], [0, 0, 1, 1], [], []>} : vector<256x32xbf16>, vector<32x128xbf16>, vector<256x128xf32> -> vector<256x128xf32>
    %6 = arith.addf %2, %5 : vector<256x128xf32>
    %c0_8 = arith.constant 0 : index
    %c0_9 = arith.constant 0 : index
    %7 = vector.load %arg5[%c0_8, %c0_9] : memref<1x128xf32, #tpu.memory_space<vmem>>, vector<1x128xf32>
    %8 = vector.broadcast %7 : vector<1x128xf32> to vector<256x128xf32>
    %9 = arith.addf %6, %8 : vector<256x128xf32>
    %10 = arith.truncf %9 : vector<256x128xf32> to vector<256x128xbf16>
    %c0_10 = arith.constant 0 : index
    %c0_11 = arith.constant 0 : index
    %11 = vector.load %arg6[%c0_10, %c0_11] : memref<256x128xbf16, #tpu.memory_space<vmem>>, vector<256x128xbf16>
    tpu.vector_store %arg6[%c0_10, %c0_11], %10 {strides = array<i32>} : memref<256x128xbf16, #tpu.memory_space<vmem>>, vector<256x128xbf16>,
    return
  }
  func.func @transform_0(%arg0: i32) -> (i32, i32) {
    %c0_i32 = arith.constant 0 : i32
    %c0_i32_0 = arith.constant 0 : i32
    return %arg0, %c0_i32 : i32, i32
  }
  func.func @transform_1(%arg0: i32) -> (i32, i32) {
    %c0_i32 = arith.constant 0 : i32
    %c0_i32_0 = arith.constant 0 : i32
    return %arg0, %c0_i32 : i32, i32
  }
  func.func @transform_2(%arg0: i32) -> (i32, i32) {
    %c0_i32 = arith.constant 0 : i32
    %c0_i32_0 = arith.constant 0 : i32
    %c0_i32_1 = arith.constant 0 : i32
    return %c0_i32, %c0_i32_0 : i32, i32
  }
  func.func @transform_3(%arg0: i32) -> (i32, i32) {
    %c0_i32 = arith.constant 0 : i32
    %c0_i32_0 = arith.constant 0 : i32
    %c0_i32_1 = arith.constant 0 : i32
    return %c0_i32, %c0_i32_0 : i32, i32
  }
  func.func @transform_4(%arg0: i32) -> (i32, i32) {
    %c0_i32 = arith.constant 0 : i32
    %c0_i32_0 = arith.constant 0 : i32
    %c0_i32_1 = arith.constant 0 : i32
    return %c0_i32, %c0_i32_0 : i32, i32
  }
  func.func @transform_5(%arg0: i32) -> (i32, i32) {
    %c0_i32 = arith.constant 0 : i32
    %c0_i32_0 = arith.constant 0 : i32
    return %arg0, %c0_i32 : i32, i32
  }
}

</mosaic_0001>

<llo_original>
// kernel: tpu_custom_call.1
$region0: #{tpu_custom_call.1}
  #allocation0 [shape = 'u32[]', space=smem, size = 0x4, offset = 0x4, fixed_abs, tag = 'smem constant byte address 0x4 - core index']
  #allocation1 [shape = 'u32[144,128]{1,0:T(1,128)}', space=vmem, size = 0x12000, scoped, tag = 'internal scratch']
  %s0 = inlined_call_operand.vmem [shape: bf16[256,32], index: 0, kind: input, shape index: {}]
  %s1 = inlined_call_operand.vmem [shape: bf16[256,32], index: 1, kind: input, shape index: {}]
  %s2 = inlined_call_operand.vmem [shape: bf16[32,128], index: 2, kind: input, shape index: {}]
  %s3 = inlined_call_operand.vmem [shape: bf16[32,128], index: 3, kind: input, shape index: {}]
  %s4 = inlined_call_operand.vmem [shape: f32[1,128], index: 4, kind: input, shape index: {}]
  %s5 = inlined_call_operand.hbm [shape: bf16[256,128], index: 5, kind: output, shape index: {}]
  %s6 = sld [smem:[#allocation0]]
  $region30: #{tpu_custom_call.1} parent=0
    _
  %s8 = ssub.s32 1, %s6
  %s9 = scalar_select 0, %s8, %s6
  $region1: #{tpu_custom_call.1} parent=0
    #allocation2 [shape = 'u8[65536]{0}', space=vmem, size = 0x10000, scoped, tag = 'output window, operand 0, single buffered']
    #allocation3 [shape = 's32[1]{0}', space=sflag, size = 0x4, scoped, tag = 'scoped memory for tpu_custom_call.1']
    %10 = vsyncpa [#allocation3], 0
    // Predicated region
    $region2: #{tpu_custom_call.1} parent=1 // pred_check
      _
    $region3: #{tpu_custom_call.1} parent=1 // pred_check_branch
      %12 = sbr.rel (0) target = $region5
    $region4: #{tpu_custom_call.1} parent=1 // pred_region
      _
    $region5: #{tpu_custom_call.1} parent=1 // pred_fallthru
      _
    // Predicated region
    $region6: #{tpu_custom_call.1} parent=1 // pred_check
      _
    $region7: #{tpu_custom_call.1} parent=1 // pred_check_branch
      %14 = sbr.rel (0) target = $region9
    $region8: #{tpu_custom_call.1} parent=1 // pred_region
      _
    $region9: #{tpu_custom_call.1} parent=1 // pred_fallthru
      _
    // Predicated region
    $region10: #{tpu_custom_call.1} parent=1 // pred_check
      _
    $region11: #{tpu_custom_call.1} parent=1 // pred_check_branch
      %16 = sbr.rel (0) target = $region13
    $region12: #{tpu_custom_call.1} parent=1 // pred_region
      _
    $region13: #{tpu_custom_call.1} parent=1 // pred_fallthru
      _
    // Predicated region
    $region14: #{tpu_custom_call.1} parent=1 // pred_check
      _
    $region15: #{tpu_custom_call.1} parent=1 // pred_check_branch
      %18 = sbr.rel (0) target = $region17
    $region16: #{tpu_custom_call.1} parent=1 // pred_region
      _
    $region17: #{tpu_custom_call.1} parent=1 // pred_fallthru
      _
    // Predicated region
    $region18: #{tpu_custom_call.1} parent=1 // pred_check
      _
    $region19: #{tpu_custom_call.1} parent=1 // pred_check_branch
      %20 = sbr.rel (0) target = $region21
    $region20: #{tpu_custom_call.1} parent=1 // pred_region
      _
    $region21: #{tpu_custom_call.1} parent=1 // pred_fallthru
      _
    %v22 = vld [vmem:[%s0] sm:$0xf]
    %v23 = vld [vmem:[%s0 + $0x4] sm:$0xf]
    %v24 = vld [vmem:[%s0 + $0x8] sm:$0xf]
    %v25 = vld [vmem:[%s0 + $0xc] sm:$0xf]
    %v26 = vld [vmem:[%s0 + $0x10] sm:$0xf]
    %v27 = vld [vmem:[%s0 + $0x14] sm:$0xf]
    %v28 = vld [vmem:[%s0 + $0x18] sm:$0xf]
    %v29 = vld [vmem:[%s0 + $0x1c] sm:$0xf]
    %v30 = vld [vmem:[%s0 + $0x20] sm:$0xf]
    %v31 = vld [vmem:[%s0 + $0x24] sm:$0xf]
    %v32 = vld [vmem:[%s0 + $0x28] sm:$0xf]
    %v33 = vld [vmem:[%s0 + $0x2c] sm:$0xf]
    %v34 = vld [vmem:[%s0 + $0x30] sm:$0xf]
    %v35 = vld [vmem:[%s0 + $0x34] sm:$0xf]
    %v36 = vld [vmem:[%s0 + $0x38] sm:$0xf]
    %v37 = vld [vmem:[%s0 + $0x3c] sm:$0xf]
    %v38 = vld [vmem:[%s0 + $0x40] sm:$0xf]
    %v39 = vld [vmem:[%s0 + $0x44] sm:$0xf]
    %v40 = vld [vmem:[%s0 + $0x48] sm:$0xf]
    %v41 = vld [vmem:[%s0 + $0x4c] sm:$0xf]
    %v42 = vld [vmem:[%s0 + $0x50] sm:$0xf]
    %v43 = vld [vmem:[%s0 + $0x54] sm:$0xf]
    %v44 = vld [vmem:[%s0 + $0x58] sm:$0xf]
    %v45 = vld [vmem:[%s0 + $0x5c] sm:$0xf]
    %v46 = vld [vmem:[%s0 + $0x60] sm:$0xf]
    %v47 = vld [vmem:[%s0 + $0x64] sm:$0xf]
    %v48 = vld [vmem:[%s0 + $0x68] sm:$0xf]
    %v49 = vld [vmem:[%s0 + $0x6c] sm:$0xf]
    %v50 = vld [vmem:[%s0 + $0x70] sm:$0xf]
    %v51 = vld [vmem:[%s0 + $0x74] sm:$0xf]
    %v52 = vld [vmem:[%s0 + $0x78] sm:$0xf]
    %v53 = vld [vmem:[%s0 + $0x7c] sm:$0xf]
    %v54 = vld [vmem:[%s2] sm:$0xf]
    %v55 = vld [vmem:[%s2 + $0x4] sm:$0xf]
    %v56 = vld [vmem:[%s2 + $0x8] sm:$0xf]
    %v57 = vld [vmem:[%s2 + $0xc] sm:$0xf]
    %v58 = vld [vmem:[%s1] sm:$0xf]
    %v59 = vld [vmem:[%s1 + $0x4] sm:$0xf]
    %v60 = vld [vmem:[%s1 + $0x8] sm:$0xf]
    %v61 = vld [vmem:[%s1 + $0xc] sm:$0xf]
    %v62 = vld [vmem:[%s1 + $0x10] sm:$0xf]
    %v63 = vld [vmem:[%s1 + $0x14] sm:$0xf]
    %v64 = vld [vmem:[%s1 + $0x18] sm:$0xf]
    %v65 = vld [vmem:[%s1 + $0x1c] sm:$0xf]
    %v66 = vld [vmem:[%s1 + $0x20] sm:$0xf]
    %v67 = vld [vmem:[%s1 + $0x24] sm:$0xf]
    %v68 = vld [vmem:[%s1 + $0x28] sm:$0xf]
    %v69 = vld [vmem:[%s1 + $0x2c] sm:$0xf]
    %v70 = vld [vmem:[%s1 + $0x30] sm:$0xf]
    %v71 = vld [vmem:[%s1 + $0x34] sm:$0xf]
    %v72 = vld [vmem:[%s1 + $0x38] sm:$0xf]
    %v73 = vld [vmem:[%s1 + $0x3c] sm:$0xf]
    %v74 = vld [vmem:[%s1 + $0x40] sm:$0xf]
    %v75 = vld [vmem:[%s1 + $0x44] sm:$0xf]
    %v76 = vld [vmem:[%s1 + $0x48] sm:$0xf]
    %v77 = vld [vmem:[%s1 + $0x4c] sm:$0xf]
    %v78 = vld [vmem:[%s1 + $0x50] sm:$0xf]
    %v79 = vld [vmem:[%s1 + $0x54] sm:$0xf]
    %v80 = vld [vmem:[%s1 + $0x58] sm:$0xf]
    %v81 = vld [vmem:[%s1 + $0x5c] sm:$0xf]
    %v82 = vld [vmem:[%s1 + $0x60] sm:$0xf]
    %v83 = vld [vmem:[%s1 + $0x64] sm:$0xf]
    %v84 = vld [vmem:[%s1 + $0x68] sm:$0xf]
    %v85 = vld [vmem:[%s1 + $0x6c] sm:$0xf]
    %v86 = vld [vmem:[%s1 + $0x70] sm:$0xf]
    %v87 = vld [vmem:[%s1 + $0x74] sm:$0xf]
    %v88 = vld [vmem:[%s1 + $0x78] sm:$0xf]
    %v89 = vld [vmem:[%s1 + $0x7c] sm:$0xf]
    %v90 = vld [vmem:[%s3] sm:$0xf]
    %v91 = vld [vmem:[%s3 + $0x4] sm:$0xf]
    %v92 = vld [vmem:[%s3 + $0x8] sm:$0xf]
    %v93 = vld [vmem:[%s3 + $0xc] sm:$0xf]
    %v126 = vunpack.c.l.b16 %v58
    %v127 = vunpack.c.l.b16 %v59
    %v128 = vunpack.c.l.b16 %v60
    %v129 = vunpack.c.l.b16 %v61
    %v130 = vunpack.c.l.b16 %v62
    %v131 = vunpack.c.l.b16 %v63
    %v132 = vunpack.c.l.b16 %v64
    %v133 = vunpack.c.l.b16 %v65
    %v134 = vunpack.c.l.b16 %v66
    %v135 = vunpack.c.l.b16 %v67
    %v136 = vunpack.c.l.b16 %v68
    %v137 = vunpack.c.l.b16 %v69
    %v138 = vunpack.c.l.b16 %v70
    %v139 = vunpack.c.l.b16 %v71
    %v140 = vunpack.c.l.b16 %v72
    %v141 = vunpack.c.l.b16 %v73
    %v142 = vunpack.c.l.b16 %v74
    %v143 = vunpack.c.l.b16 %v75
    %v144 = vunpack.c.l.b16 %v76
    %v145 = vunpack.c.l.b16 %v77
    %v146 = vunpack.c.l.b16 %v78
    %v147 = vunpack.c.l.b16 %v79
    %v148 = vunpack.c.l.b16 %v80
    %v149 = vunpack.c.l.b16 %v81
    %v150 = vunpack.c.l.b16 %v82
    %v151 = vunpack.c.l.b16 %v83
    %v152 = vunpack.c.l.b16 %v84
    %v153 = vunpack.c.l.b16 %v85
    %v154 = vunpack.c.l.b16 %v86
    %v155 = vunpack.c.l.b16 %v87
    %v156 = vunpack.c.l.b16 %v88
    %v157 = vunpack.c.l.b16 %v89
    %v158 = vpack.c.b16 %v127, %v126
    %v159 = vpack.c.b16 %v129, %v128
    %v160 = vpack.c.b16 %v131, %v130
    %v161 = vpack.c.b16 %v133, %v132
    %v162 = vpack.c.b16 %v135, %v134
    %v163 = vpack.c.b16 %v137, %v136
    %v164 = vpack.c.b16 %v139, %v138
    %v165 = vpack.c.b16 %v141, %v140
    %v166 = vpack.c.b16 %v143, %v142
    %v167 = vpack.c.b16 %v145, %v144
    %v168 = vpack.c.b16 %v147, %v146
    %v169 = vpack.c.b16 %v149, %v148
    %v170 = vpack.c.b16 %v151, %v150
    %v171 = vpack.c.b16 %v153, %v152
    %v172 = vpack.c.b16 %v155, %v154
    %v173 = vpack.c.b16 %v157, %v156
    %v178 = vunpack.c.l.b16 %v90
    %v179 = vunpack.c.l.b16 %v91
    %v180 = vunpack.c.l.b16 %v92
    %v181 = vunpack.c.l.b16 %v93
    %v182 = vpack.c.b16 %v179, %v178
    %v183 = vpack.c.b16 %v181, %v180
    %vm186 = vcmask 261120
    %v188 = vsel %vm186, %v158, 0
    %v191 = vsel %vm186, %v159, 0
    %v194 = vsel %vm186, %v160, 0
    %v197 = vsel %vm186, %v161, 0
    %v200 = vsel %vm186, %v162, 0
    %v203 = vsel %vm186, %v163, 0
    %v206 = vsel %vm186, %v164, 0
    %v209 = vsel %vm186, %v165, 0
    %v212 = vsel %vm186, %v166, 0
    %v215 = vsel %vm186, %v167, 0
    %v218 = vsel %vm186, %v168, 0
    %v221 = vsel %vm186, %v169, 0
    %v224 = vsel %vm186, %v170, 0
    %v227 = vsel %vm186, %v171, 0
    %v230 = vsel %vm186, %v172, 0
    %v233 = vsel %vm186, %v173, 0
    %235 = vmatprep.subr.bf16.mxu0 0
    %236 = vmatpush1.bf16.msra.mxu0 %v182
    %237 = vmatprep.subr.bf16.mxu0 0
    %238 = vmatpush1.bf16.msra.mxu0 %v183
    %239 = vmatprep.subr.bf16.mxu0 0
    %240 = vmatpush1.bf16.msra.mxu0 0
    %241 = vmatprep.subr.bf16.mxu0 0
    %242 = vmatpush1.bf16.msra.mxu0 0
    %243 = vmatprep.subr.bf16.mxu0 0
    %244 = vmatpush1.bf16.msra.mxu0 0
    %245 = vmatprep.subr.bf16.mxu0 0
    %246 = vmatpush1.bf16.msra.mxu0 0
    %247 = vmatprep.subr.bf16.mxu0 0
    %248 = vmatpush1.bf16.msra.mxu0 0
    %249 = vmatprep.subr.bf16.mxu0 0
    %250 = vmatpush1.bf16.msra.mxu0 0
    %251 = vmatprep.subr.bf16.mxu0 0
    %252 = vmatpush1.bf16.msra.mxu0 0
    %253 = vmatprep.subr.bf16.mxu0 0
    %254 = vmatpush1.bf16.msra.mxu0 0
    %255 = vmatprep.subr.bf16.mxu0 0
    %256 = vmatpush1.bf16.msra.mxu0 0
    %257 = vmatprep.subr.bf16.mxu0 0
    %258 = vmatpush1.bf16.msra.mxu0 0
    %259 = vmatprep.subr.bf16.mxu0 0
    %260 = vmatpush1.bf16.msra.mxu0 0
    %261 = vmatprep.subr.bf16.mxu0 0
    %262 = vmatpush1.bf16.msra.mxu0 0
    %263 = vmatprep.subr.bf16.mxu0 0
    %264 = vmatpush1.bf16.msra.mxu0 0
    %265 = vmatprep.subr.bf16.mxu0 0
    %266 = vmatpush1.bf16.msra.mxu0 0
    %267 = vmatprep.mubr.bf16.mxu0 0
    %268 = vmatmul.mubr.bf16.gmra.mrb[0].mxu0 %v188
    %v269 = vpop.f32.mrb[0].mxu0
    %v270 = vadd.f32 0.0, %v269
    %v271 = vpop.f32.mrb[0].mxu0
    %v272 = vpop.f32.mrb[0].mxu0
    %v273 = vadd.f32 0.0, %v272
    %v274 = vpop.f32.mrb[0].mxu0
    %275 = vmatprep.mubr.bf16.mxu0 0
    %276 = vmatmul.mubr.bf16.gmra.mrb[0].mxu0 %v191
    %v277 = vpop.f32.mrb[0].mxu0
    %v278 = vadd.f32 0.0, %v277
    %v279 = vpop.f32.mrb[0].mxu0
    %v280 = vpop.f32.mrb[0].mxu0
    %v281 = vadd.f32 0.0, %v280
    %v282 = vpop.f32.mrb[0].mxu0
    %283 = vmatprep.mubr.bf16.mxu0 0
    %284 = vmatmul.mubr.bf16.gmra.mrb[0].mxu0 %v194
    %v285 = vpop.f32.mrb[0].mxu0
    %v286 = vadd.f32 0.0, %v285
    %v287 = vpop.f32.mrb[0].mxu0
    %v288 = vpop.f32.mrb[0].mxu0
    %v289 = vadd.f32 0.0, %v288
    %v290 = vpop.f32.mrb[0].mxu0
    %291 = vmatprep.mubr.bf16.mxu0 0
    %292 = vmatmul.mubr.bf16.gmra.mrb[0].mxu0 %v197
    %v293 = vpop.f32.mrb[0].mxu0
    %v294 = vadd.f32 0.0, %v293
    %v295 = vpop.f32.mrb[0].mxu0
    %v296 = vpop.f32.mrb[0].mxu0
    %v297 = vadd.f32 0.0, %v296
    %v298 = vpop.f32.mrb[0].mxu0
    %299 = vmatprep.mubr.bf16.mxu0 0
    %300 = vmatmul.mubr.bf16.gmra.mrb[0].mxu0 %v200
    %v301 = vpop.f32.mrb[0].mxu0
    %v302 = vadd.f32 0.0, %v301
    %v303 = vpop.f32.mrb[0].mxu0
    %v304 = vpop.f32.mrb[0].mxu0
    %v305 = vadd.f32 0.0, %v304
    %v306 = vpop.f32.mrb[0].mxu0
    %307 = vmatprep.mubr.bf16.mxu0 0
    %308 = vmatmul.mubr.bf16.gmra.mrb[0].mxu0 %v203
    %v309 = vpop.f32.mrb[0].mxu0
    %v310 = vadd.f32 0.0, %v309
    %v311 = vpop.f32.mrb[0].mxu0
    %v312 = vpop.f32.mrb[0].mxu0
    %v313 = vadd.f32 0.0, %v312
    %v314 = vpop.f32.mrb[0].mxu0
    %315 = vmatprep.mubr.bf16.mxu0 0
    %316 = vmatmul.mubr.bf16.gmra.mrb[0].mxu0 %v206
    %v317 = vpop.f32.mrb[0].mxu0
    %v318 = vadd.f32 0.0, %v317
    %v319 = vpop.f32.mrb[0].mxu0
    %v320 = vpop.f32.mrb[0].mxu0
    %v321 = vadd.f32 0.0, %v320
    %v322 = vpop.f32.mrb[0].mxu0
    %323 = vmatprep.mubr.bf16.mxu0 0
    %324 = vmatmul.mubr.bf16.gmra.mrb[0].mxu0 %v209
    %v325 = vpop.f32.mrb[0].mxu0
    %v326 = vadd.f32 0.0, %v325
    %v327 = vpop.f32.mrb[0].mxu0
    %v328 = vpop.f32.mrb[0].mxu0
    %v329 = vadd.f32 0.0, %v328
    %v330 = vpop.f32.mrb[0].mxu0
    %331 = vmatprep.mubr.bf16.mxu0 0
    %332 = vmatmul.mubr.bf16.gmra.mrb[0].mxu0 %v212
    %v333 = vpop.f32.mrb[0].mxu0
    %v334 = vadd.f32 0.0, %v333
    %v335 = vpop.f32.mrb[0].mxu0
    %v336 = vpop.f32.mrb[0].mxu0
    %v337 = vadd.f32 0.0, %v336
    %v338 = vpop.f32.mrb[0].mxu0
    %339 = vmatprep.mubr.bf16.mxu0 0
    %340 = vmatmul.mubr.bf16.gmra.mrb[0].mxu0 %v215
    %v341 = vpop.f32.mrb[0].mxu0
    %v342 = vadd.f32 0.0, %v341
    %v343 = vpop.f32.mrb[0].mxu0
    %v344 = vpop.f32.mrb[0].mxu0
    %v345 = vadd.f32 0.0, %v344
    %v346 = vpop.f32.mrb[0].mxu0
    %347 = vmatprep.mubr.bf16.mxu0 0
    %348 = vmatmul.mubr.bf16.gmra.mrb[0].mxu0 %v218
    %v349 = vpop.f32.mrb[0].mxu0
    %v350 = vadd.f32 0.0, %v349
    %v351 = vpop.f32.mrb[0].mxu0
    %v352 = vpop.f32.mrb[0].mxu0
    %v353 = vadd.f32 0.0, %v352
    %v354 = vpop.f32.mrb[0].mxu0
    %355 = vmatprep.mubr.bf16.mxu0 0
    %356 = vmatmul.mubr.bf16.gmra.mrb[0].mxu0 %v221
    %v357 = vpop.f32.mrb[0].mxu0
    %v358 = vadd.f32 0.0, %v357
    %v359 = vpop.f32.mrb[0].mxu0
    %v360 = vpop.f32.mrb[0].mxu0
    %v361 = vadd.f32 0.0, %v360
    %v362 = vpop.f32.mrb[0].mxu0
    %363 = vmatprep.mubr.bf16.mxu0 0
    %364 = vmatmul.mubr.bf16.gmra.mrb[0].mxu0 %v224
    %v365 = vpop.f32.mrb[0].mxu0
    %v366 = vadd.f32 0.0, %v365
    %v367 = vpop.f32.mrb[0].mxu0
    %v368 = vpop.f32.mrb[0].mxu0
    %v369 = vadd.f32 0.0, %v368
    %v370 = vpop.f32.mrb[0].mxu0
    %371 = vmatprep.mubr.bf16.mxu0 0
    %372 = vmatmul.mubr.bf16.gmra.mrb[0].mxu0 %v227
    %v373 = vpop.f32.mrb[0].mxu0
    %v374 = vadd.f32 0.0, %v373
    %v375 = vpop.f32.mrb[0].mxu0
    %v376 = vpop.f32.mrb[0].mxu0
    %v377 = vadd.f32 0.0, %v376
    %v378 = vpop.f32.mrb[0].mxu0
    %379 = vmatprep.mubr.bf16.mxu0 0
    %380 = vmatmul.mubr.bf16.gmra.mrb[0].mxu0 %v230
    %v381 = vpop.f32.mrb[0].mxu0
    %v382 = vadd.f32 0.0, %v381
    %v383 = vpop.f32.mrb[0].mxu0
    %v384 = vpop.f32.mrb[0].mxu0
    %v385 = vadd.f32 0.0, %v384
    %v386 = vpop.f32.mrb[0].mxu0
    %387 = vmatprep.mubr.bf16.mxu0 0
    %388 = vmatmul.mubr.bf16.gmra.mrb[0].mxu0 %v233
    %v389 = vpop.f32.mrb[0].mxu0
    %v390 = vadd.f32 0.0, %v389
    %v391 = vpop.f32.mrb[0].mxu0
    %v392 = vpop.f32.mrb[0].mxu0
    %v393 = vadd.f32 0.0, %v392
    %v394 = vpop.f32.mrb[0].mxu0
    %395 = vdwg.mxu0
    %v428 = vunpack.c.l.b16 %v22
    %v429 = vunpack.c.l.b16 %v23
    %v430 = vunpack.c.l.b16 %v24
    %v431 = vunpack.c.l.b16 %v25
    %v432 = vunpack.c.l.b16 %v26
    %v433 = vunpack.c.l.b16 %v27
    %v434 = vunpack.c.l.b16 %v28
    %v435 = vunpack.c.l.b16 %v29
    %v436 = vunpack.c.l.b16 %v30
    %v437 = vunpack.c.l.b16 %v31
    %v438 = vunpack.c.l.b16 %v32
    %v439 = vunpack.c.l.b16 %v33
    %v440 = vunpack.c.l.b16 %v34
    %v441 = vunpack.c.l.b16 %v35
    %v442 = vunpack.c.l.b16 %v36
    %v443 = vunpack.c.l.b16 %v37
    %v444 = vunpack.c.l.b16 %v38
    %v445 = vunpack.c.l.b16 %v39
    %v446 = vunpack.c.l.b16 %v40
    %v447 = vunpack.c.l.b16 %v41
    %v448 = vunpack.c.l.b16 %v42
    %v449 = vunpack.c.l.b16 %v43
    %v450 = vunpack.c.l.b16 %v44
    %v451 = vunpack.c.l.b16 %v45
    %v452 = vunpack.c.l.b16 %v46
    %v453 = vunpack.c.l.b16 %v47
    %v454 = vunpack.c.l.b16 %v48
    %v455 = vunpack.c.l.b16 %v49
    %v456 = vunpack.c.l.b16 %v50
    %v457 = vunpack.c.l.b16 %v51
    %v458 = vunpack.c.l.b16 %v52
    %v459 = vunpack.c.l.b16 %v53
    %v460 = vpack.c.b16 %v429, %v428
    %v461 = vpack.c.b16 %v431, %v430
    %v462 = vpack.c.b16 %v433, %v432
    %v463 = vpack.c.b16 %v435, %v434
    %v464 = vpack.c.b16 %v437, %v436
    %v465 = vpack.c.b16 %v439, %v438
    %v466 = vpack.c.b16 %v441, %v440
    %v467 = vpack.c.b16 %v443, %v442
    %v468 = vpack.c.b16 %v445, %v444
    %v469 = vpack.c.b16 %v447, %v446
    %v470 = vpack.c.b16 %v449, %v448
    %v471 = vpack.c.b16 %v451, %v450
    %v472 = vpack.c.b16 %v453, %v452
    %v473 = vpack.c.b16 %v455, %v454
    %v474 = vpack.c.b16 %v457, %v456
    %v475 = vpack.c.b16 %v459, %v458
    %v480 = vunpack.c.l.b16 %v54
    %v481 = vunpack.c.l.b16 %v55
    %v482 = vunpack.c.l.b16 %v56
    %v483 = vunpack.c.l.b16 %v57
    %v484 = vpack.c.b16 %v481, %v480
    %v485 = vpack.c.b16 %v483, %v482
    %v489 = vsel %vm186, %v460, 0
    %v492 = vsel %vm186, %v461, 0
    %v495 = vsel %vm186, %v462, 0
    %v498 = vsel %vm186, %v463, 0
    %v501 = vsel %vm186, %v464, 0
    %v504 = vsel %vm186, %v465, 0
    %v507 = vsel %vm186, %v466, 0
    %v510 = vsel %vm186, %v467, 0
    %v513 = vsel %vm186, %v468, 0
    %v516 = vsel %vm186, %v469, 0
    %v519 = vsel %vm186, %v470, 0
    %v522 = vsel %vm186, %v471, 0
    %v525 = vsel %vm186, %v472, 0
    %v528 = vsel %vm186, %v473, 0
    %v531 = vsel %vm186, %v474, 0
    %v534 = vsel %vm186, %v475, 0
    %536 = vmatprep.subr.bf16.mxu0 0
    %537 = vmatpush1.bf16.msra.mxu0 %v484
    %538 = vmatprep.subr.bf16.mxu0 0
    %539 = vmatpush1.bf16.msra.mxu0 %v485
    %540 = vmatprep.subr.bf16.mxu0 0
    %541 = vmatpush1.bf16.msra.mxu0 0
    %542 = vmatprep.subr.bf16.mxu0 0
    %543 = vmatpush1.bf16.msra.mxu0 0
    %544 = vmatprep.subr.bf16.mxu0 0
    %545 = vmatpush1.bf16.msra.mxu0 0
    %546 = vmatprep.subr.bf16.mxu0 0
    %547 = vmatpush1.bf16.msra.mxu0 0
    %548 = vmatprep.subr.bf16.mxu0 0
    %549 = vmatpush1.bf16.msra.mxu0 0
    %550 = vmatprep.subr.bf16.mxu0 0
    %551 = vmatpush1.bf16.msra.mxu0 0
    %552 = vmatprep.subr.bf16.mxu0 0
    %553 = vmatpush1.bf16.msra.mxu0 0
    %554 = vmatprep.subr.bf16.mxu0 0
    %555 = vmatpush1.bf16.msra.mxu0 0
    %556 = vmatprep.subr.bf16.mxu0 0
    %557 = vmatpush1.bf16.msra.mxu0 0
    %558 = vmatprep.subr.bf16.mxu0 0
    %559 = vmatpush1.bf16.msra.mxu0 0
    %560 = vmatprep.subr.bf16.mxu0 0
    %561 = vmatpush1.bf16.msra.mxu0 0
    %562 = vmatprep.subr.bf16.mxu0 0
    %563 = vmatpush1.bf16.msra.mxu0 0
    %564 = vmatprep.subr.bf16.mxu0 0
    %565 = vmatpush1.bf16.msra.mxu0 0
    %566 = vmatprep.subr.bf16.mxu0 0
    %567 = vmatpush1.bf16.msra.mxu0 0
    %568 = vmatprep.mubr.bf16.mxu0 0
    %569 = vmatmul.mubr.bf16.gmra.mrb[0].mxu0 %v489
    %v570 = vpop.f32.mrb[0].mxu0
    %v571 = vadd.f32 %v270, %v570
    %v572 = vpop.f32.mrb[0].mxu0
    %v573 = vpop.f32.mrb[0].mxu0
    %v574 = vadd.f32 %v273, %v573
    %v575 = vpop.f32.mrb[0].mxu0
    %576 = vmatprep.mubr.bf16.mxu0 0
    %577 = vmatmul.mubr.bf16.gmra.mrb[0].mxu0 %v492
    %v578 = vpop.f32.mrb[0].mxu0
    %v579 = vadd.f32 %v278, %v578
    %v580 = vpop.f32.mrb[0].mxu0
    %v581 = vpop.f32.mrb[0].mxu0
    %v582 = vadd.f32 %v281, %v581
    %v583 = vpop.f32.mrb[0].mxu0
    %584 = vmatprep.mubr.bf16.mxu0 0
    %585 = vmatmul.mubr.bf16.gmra.mrb[0].mxu0 %v495
    %v586 = vpop.f32.mrb[0].mxu0
    %v587 = vadd.f32 %v286, %v586
    %v588 = vpop.f32.mrb[0].mxu0
    %v589 = vpop.f32.mrb[0].mxu0
    %v590 = vadd.f32 %v289, %v589
    %v591 = vpop.f32.mrb[0].mxu0
    %592 = vmatprep.mubr.bf16.mxu0 0
    %593 = vmatmul.mubr.bf16.gmra.mrb[0].mxu0 %v498
    %v594 = vpop.f32.mrb[0].mxu0
    %v595 = vadd.f32 %v294, %v594
    %v596 = vpop.f32.mrb[0].mxu0
    %v597 = vpop.f32.mrb[0].mxu0
    %v598 = vadd.f32 %v297, %v597
    %v599 = vpop.f32.mrb[0].mxu0
    %600 = vmatprep.mubr.bf16.mxu0 0
    %601 = vmatmul.mubr.bf16.gmra.mrb[0].mxu0 %v501
    %v602 = vpop.f32.mrb[0].mxu0
    %v603 = vadd.f32 %v302, %v602
    %v604 = vpop.f32.mrb[0].mxu0
    %v605 = vpop.f32.mrb[0].mxu0
    %v606 = vadd.f32 %v305, %v605
    %v607 = vpop.f32.mrb[0].mxu0
    %608 = vmatprep.mubr.bf16.mxu0 0
    %609 = vmatmul.mubr.bf16.gmra.mrb[0].mxu0 %v504
    %v610 = vpop.f32.mrb[0].mxu0
    %v611 = vadd.f32 %v310, %v610
    %v612 = vpop.f32.mrb[0].mxu0
    %v613 = vpop.f32.mrb[0].mxu0
    %v614 = vadd.f32 %v313, %v613
    %v615 = vpop.f32.mrb[0].mxu0
    %616 = vmatprep.mubr.bf16.mxu0 0
    %617 = vmatmul.mubr.bf16.gmra.mrb[0].mxu0 %v507
    %v618 = vpop.f32.mrb[0].mxu0
    %v619 = vadd.f32 %v318, %v618
    %v620 = vpop.f32.mrb[0].mxu0
    %v621 = vpop.f32.mrb[0].mxu0
    %v622 = vadd.f32 %v321, %v621
    %v623 = vpop.f32.mrb[0].mxu0
    %624 = vmatprep.mubr.bf16.mxu0 0
    %625 = vmatmul.mubr.bf16.gmra.mrb[0].mxu0 %v510
    %v626 = vpop.f32.mrb[0].mxu0
    %v627 = vadd.f32 %v326, %v626
    %v628 = vpop.f32.mrb[0].mxu0
    %v629 = vpop.f32.mrb[0].mxu0
    %v630 = vadd.f32 %v329, %v629
    %v631 = vpop.f32.mrb[0].mxu0
    %632 = vmatprep.mubr.bf16.mxu0 0
    %633 = vmatmul.mubr.bf16.gmra.mrb[0].mxu0 %v513
    %v634 = vpop.f32.mrb[0].mxu0
    %v635 = vadd.f32 %v334, %v634
    %v636 = vpop.f32.mrb[0].mxu0
    %v637 = vpop.f32.mrb[0].mxu0
    %v638 = vadd.f32 %v337, %v637
    %v639 = vpop.f32.mrb[0].mxu0
    %640 = vmatprep.mubr.bf16.mxu0 0
    %641 = vmatmul.mubr.bf16.gmra.mrb[0].mxu0 %v516
    %v642 = vpop.f32.mrb[0].mxu0
    %v643 = vadd.f32 %v342, %v642
    %v644 = vpop.f32.mrb[0].mxu0
    %v645 = vpop.f32.mrb[0].mxu0
    %v646 = vadd.f32 %v345, %v645
    %v647 = vpop.f32.mrb[0].mxu0
    %648 = vmatprep.mubr.bf16.mxu0 0
    %649 = vmatmul.mubr.bf16.gmra.mrb[0].mxu0 %v519
    %v650 = vpop.f32.mrb[0].mxu0
    %v651 = vadd.f32 %v350, %v650
    %v652 = vpop.f32.mrb[0].mxu0
    %v653 = vpop.f32.mrb[0].mxu0
    %v654 = vadd.f32 %v353, %v653
    %v655 = vpop.f32.mrb[0].mxu0
    %656 = vmatprep.mubr.bf16.mxu0 0
    %657 = vmatmul.mubr.bf16.gmra.mrb[0].mxu0 %v522
    %v658 = vpop.f32.mrb[0].mxu0
    %v659 = vadd.f32 %v358, %v658
    %v660 = vpop.f32.mrb[0].mxu0
    %v661 = vpop.f32.mrb[0].mxu0
    %v662 = vadd.f32 %v361, %v661
    %v663 = vpop.f32.mrb[0].mxu0
    %664 = vmatprep.mubr.bf16.mxu0 0
    %665 = vmatmul.mubr.bf16.gmra.mrb[0].mxu0 %v525
    %v666 = vpop.f32.mrb[0].mxu0
    %v667 = vadd.f32 %v366, %v666
    %v668 = vpop.f32.mrb[0].mxu0
    %v669 = vpop.f32.mrb[0].mxu0
    %v670 = vadd.f32 %v369, %v669
    %v671 = vpop.f32.mrb[0].mxu0
    %672 = vmatprep.mubr.bf16.mxu0 0
    %673 = vmatmul.mubr.bf16.gmra.mrb[0].mxu0 %v528
    %v674 = vpop.f32.mrb[0].mxu0
    %v675 = vadd.f32 %v374, %v674
    %v676 = vpop.f32.mrb[0].mxu0
    %v677 = vpop.f32.mrb[0].mxu0
    %v678 = vadd.f32 %v377, %v677
    %v679 = vpop.f32.mrb[0].mxu0
    %680 = vmatprep.mubr.bf16.mxu0 0
    %681 = vmatmul.mubr.bf16.gmra.mrb[0].mxu0 %v531
    %v682 = vpop.f32.mrb[0].mxu0
    %v683 = vadd.f32 %v382, %v682
    %v684 = vpop.f32.mrb[0].mxu0
    %v685 = vpop.f32.mrb[0].mxu0
    %v686 = vadd.f32 %v385, %v685
    %v687 = vpop.f32.mrb[0].mxu0
    %688 = vmatprep.mubr.bf16.mxu0 0
    %689 = vmatmul.mubr.bf16.gmra.mrb[0].mxu0 %v534
    %v690 = vpop.f32.mrb[0].mxu0
    %v691 = vadd.f32 %v390, %v690
    %v692 = vpop.f32.mrb[0].mxu0
    %v693 = vpop.f32.mrb[0].mxu0
    %v694 = vadd.f32 %v393, %v693
    %v695 = vpop.f32.mrb[0].mxu0
    %696 = vdwg.mxu0
    %v697 = vld [vmem:[%s4] sm:$0x1]
    %v699 = vlaneseq
    %v700 = vshrl.u32 %v699, 7
    %v701 = vsub.s32 0, %v700
    %v702 = vrot.slane %v697, %v701
    %v704 = vadd.f32 %v571, %v702
    %v705 = vadd.f32 %v574, %v702
    %v706 = vadd.f32 %v579, %v702
    %v707 = vadd.f32 %v582, %v702
    %v708 = vadd.f32 %v587, %v702
    %v709 = vadd.f32 %v590, %v702
    %v710 = vadd.f32 %v595, %v702
    %v711 = vadd.f32 %v598, %v702
    %v712 = vadd.f32 %v603, %v702
    %v713 = vadd.f32 %v606, %v702
    %v714 = vadd.f32 %v611, %v702
    %v715 = vadd.f32 %v614, %v702
    %v716 = vadd.f32 %v619, %v702
    %v717 = vadd.f32 %v622, %v702
    %v718 = vadd.f32 %v627, %v702
    %v719 = vadd.f32 %v630, %v702
    %v720 = vadd.f32 %v635, %v702
    %v721 = vadd.f32 %v638, %v702
    %v722 = vadd.f32 %v643, %v702
    %v723 = vadd.f32 %v646, %v702
    %v724 = vadd.f32 %v651, %v702
    %v725 = vadd.f32 %v654, %v702
    %v726 = vadd.f32 %v659, %v702
    %v727 = vadd.f32 %v662, %v702
    %v728 = vadd.f32 %v667, %v702
    %v729 = vadd.f32 %v670, %v702
    %v730 = vadd.f32 %v675, %v702
    %v731 = vadd.f32 %v678, %v702
    %v732 = vadd.f32 %v683, %v702
    %v733 = vadd.f32 %v686, %v702
    %v734 = vadd.f32 %v691, %v702
    %v735 = vadd.f32 %v694, %v702
    %v736 = vpack.c.bf16 %v705, %v704
    %v737 = vpack.c.bf16 %v707, %v706
    %v738 = vpack.c.bf16 %v709, %v708
    %v739 = vpack.c.bf16 %v711, %v710
    %v740 = vpack.c.bf16 %v713, %v712
    %v741 = vpack.c.bf16 %v715, %v714
    %v742 = vpack.c.bf16 %v717, %v716
    %v743 = vpack.c.bf16 %v719, %v718
    %v744 = vpack.c.bf16 %v721, %v720
    %v745 = vpack.c.bf16 %v723, %v722
    %v746 = vpack.c.bf16 %v725, %v724
    %v747 = vpack.c.bf16 %v727, %v726
    %v748 = vpack.c.bf16 %v729, %v728
    %v749 = vpack.c.bf16 %v731, %v730
    %v750 = vpack.c.bf16 %v733, %v732
    %v751 = vpack.c.bf16 %v735, %v734
    %v768 = vunpack.c.l.b16 %v736
    %v769 = vunpack.c.h.b16 %v736
    %v770 = vunpack.c.l.b16 %v737
    %v771 = vunpack.c.h.b16 %v737
    %v772 = vunpack.c.l.b16 %v738
    %v773 = vunpack.c.h.b16 %v738
    %v774 = vunpack.c.l.b16 %v739
    %v775 = vunpack.c.h.b16 %v739
    %v776 = vunpack.c.l.b16 %v740
    %v777 = vunpack.c.h.b16 %v740
    %v778 = vunpack.c.l.b16 %v741
    %v779 = vunpack.c.h.b16 %v741
    %v780 = vunpack.c.l.b16 %v742
    %v781 = vunpack.c.h.b16 %v742
    %v782 = vunpack.c.l.b16 %v743
    %v783 = vunpack.c.h.b16 %v743
    %v784 = vunpack.c.l.b16 %v744
    %v785 = vunpack.c.h.b16 %v744
    %v786 = vunpack.c.l.b16 %v745
    %v787 = vunpack.c.h.b16 %v745
    %v788 = vunpack.c.l.b16 %v746
    %v789 = vunpack.c.h.b16 %v746
    %v790 = vunpack.c.l.b16 %v747
    %v791 = vunpack.c.h.b16 %v747
    %v792 = vunpack.c.l.b16 %v748
    %v793 = vunpack.c.h.b16 %v748
    %v794 = vunpack.c.l.b16 %v749
    %v795 = vunpack.c.h.b16 %v749
    %v796 = vunpack.c.l.b16 %v750
    %v797 = vunpack.c.h.b16 %v750
    %v798 = vunpack.c.l.b16 %v751
    %v799 = vunpack.c.h.b16 %v751
    %v800 = vpack.c.b16 %v768, %v768
    %v801 = vpack.c.b16 %v769, %v769
    %v802 = vpack.c.b16 %v770, %v770
    %v803 = vpack.c.b16 %v771, %v771
    %v804 = vpack.c.b16 %v772, %v772
    %v805 = vpack.c.b16 %v773, %v773
    %v806 = vpack.c.b16 %v774, %v774
    %v807 = vpack.c.b16 %v775, %v775
    %v808 = vpack.c.b16 %v776, %v776
    %v809 = vpack.c.b16 %v777, %v777
    %v810 = vpack.c.b16 %v778, %v778
    %v811 = vpack.c.b16 %v779, %v779
    %v812 = vpack.c.b16 %v780, %v780
    %v813 = vpack.c.b16 %v781, %v781
    %v814 = vpack.c.b16 %v782, %v782
    %v815 = vpack.c.b16 %v783, %v783
    %v816 = vpack.c.b16 %v784, %v784
    %v817 = vpack.c.b16 %v785, %v785
    %v818 = vpack.c.b16 %v786, %v786
    %v819 = vpack.c.b16 %v787, %v787
    %v820 = vpack.c.b16 %v788, %v788
    %v821 = vpack.c.b16 %v789, %v789
    %v822 = vpack.c.b16 %v790, %v790
    %v823 = vpack.c.b16 %v791, %v791
    %v824 = vpack.c.b16 %v792, %v792
    %v825 = vpack.c.b16 %v793, %v793
    %v826 = vpack.c.b16 %v794, %v794
    %v827 = vpack.c.b16 %v795, %v795
    %v828 = vpack.c.b16 %v796, %v796
    %v829 = vpack.c.b16 %v797, %v797
    %v830 = vpack.c.b16 %v798, %v798
    %v831 = vpack.c.b16 %v799, %v799
    %864 = vst [vmem:[#allocation2] sm:$0xf] %v800
    %865 = vst [vmem:[#allocation2 + $0x4] sm:$0xf] %v801
    %866 = vst [vmem:[#allocation2 + $0x8] sm:$0xf] %v802
    %867 = vst [vmem:[#allocation2 + $0xc] sm:$0xf] %v803
    %868 = vst [vmem:[#allocation2 + $0x10] sm:$0xf] %v804
    %869 = vst [vmem:[#allocation2 + $0x14] sm:$0xf] %v805
    %870 = vst [vmem:[#allocation2 + $0x18] sm:$0xf] %v806
    %871 = vst [vmem:[#allocation2 + $0x1c] sm:$0xf] %v807
    %872 = vst [vmem:[#allocation2 + $0x20] sm:$0xf] %v808
    %873 = vst [vmem:[#allocation2 + $0x24] sm:$0xf] %v809
    %874 = vst [vmem:[#allocation2 + $0x28] sm:$0xf] %v810
    %875 = vst [vmem:[#allocation2 + $0x2c] sm:$0xf] %v811
    %876 = vst [vmem:[#allocation2 + $0x30] sm:$0xf] %v812
    %877 = vst [vmem:[#allocation2 + $0x34] sm:$0xf] %v813
    %878 = vst [vmem:[#allocation2 + $0x38] sm:$0xf] %v814
    %879 = vst [vmem:[#allocation2 + $0x3c] sm:$0xf] %v815
    %880 = vst [vmem:[#allocation2 + $0x40] sm:$0xf] %v816
    %881 = vst [vmem:[#allocation2 + $0x44] sm:$0xf] %v817
    %882 = vst [vmem:[#allocation2 + $0x48] sm:$0xf] %v818
    %883 = vst [vmem:[#allocation2 + $0x4c] sm:$0xf] %v819
    %884 = vst [vmem:[#allocation2 + $0x50] sm:$0xf] %v820
    %885 = vst [vmem:[#allocation2 + $0x54] sm:$0xf] %v821
    %886 = vst [vmem:[#allocation2 + $0x58] sm:$0xf] %v822
    %887 = vst [vmem:[#allocation2 + $0x5c] sm:$0xf] %v823
    %888 = vst [vmem:[#allocation2 + $0x60] sm:$0xf] %v824
    %889 = vst [vmem:[#allocation2 + $0x64] sm:$0xf] %v825
    %890 = vst [vmem:[#allocation2 + $0x68] sm:$0xf] %v826
    %891 = vst [vmem:[#allocation2 + $0x6c] sm:$0xf] %v827
    %892 = vst [vmem:[#allocation2 + $0x70] sm:$0xf] %v828
    %893 = vst [vmem:[#allocation2 + $0x74] sm:$0xf] %v829
    %894 = vst [vmem:[#allocation2 + $0x78] sm:$0xf] %v830
    %895 = vst [vmem:[#allocation2 + $0x7c] sm:$0xf] %v831
    // Predicated region
    $region22: #{tpu_custom_call.1} parent=1 // pred_check
      _
    $region23: #{tpu_custom_call.1} parent=1 // pred_check_branch
      %897 = sbr.rel (0) target = $region25
    $region24: #{tpu_custom_call.1} parent=1 // pred_region
      %s899 = ssub.s32 2048, 2048
      %900 = vsyncadd [#allocation3], %s899
      %s901 = sshll.u32 [#allocation2], 4
      %s902 = int_to_ptr.vmem [resolvable:$true] %s901
      %907 = dma.vmem_to_hbm [thread:$0]  %s902, 2048, %s5, [#allocation3], 64, 64, 4
    $region25: #{tpu_custom_call.1} parent=1 // pred_fallthru
      _
    // Predicated region
    $region26: #{tpu_custom_call.1} parent=1 // pred_check
      _
    $region27: #{tpu_custom_call.1} parent=1 // pred_check_branch
      %909 = sbr.rel (0) target = $region29
    $region28: #{tpu_custom_call.1} parent=1 // pred_region
      %910 = dma.done [#allocation3], 2048
    $region29: #{tpu_custom_call.1} parent=1 // pred_fallthru
      _
    %911 = vsyncpa [#allocation3], 1

</llo_original>
